<compile_context>
chip_gen: v6e
topology: v6e:2x2x1
jax: 0.10.0
libtpu: 0.0.40
codegen_flags: <defaults>
</compile_context>

<pallas_src>
import jax
import jax.numpy as jnp
from jax.experimental import pallas as pl
from jax.experimental.pallas import tpu as pltpu


def _round_up(v, m):
    return (v + m - 1) // m * m


def pnet_kernel(x_ref, w1_ref, b1_ref, w23_ref, b23_ref, o_ref):
    # lin1 + dropout(identity) + relu  (f32 accumulation on the MXU, f32 VPU math)
    h = jnp.dot(x_ref[...], w1_ref[...], preferred_element_type=jnp.float32)
    h = jnp.maximum(h + b1_ref[...], 0.0)
    # lin2 + dropout(identity) + lin3 folded into a single matmul (eval mode only)
    h = jnp.dot(h.astype(w23_ref.dtype), w23_ref[...],
                preferred_element_type=jnp.float32)
    o_ref[...] = jnp.tanh(h + b23_ref[...]).astype(o_ref.dtype)


def prepare_params(params, *, mxu_dtype=jnp.bfloat16):
    """One-time fold + pad + cast, hoisted out of the per-call path.

    Eval-mode only (dropout = identity):  W23 = W2 @ W3,  b23 = b2 @ W3 + b3.
    Weights stored as (in, out); biases as (1, out). Biases stay f32.
    """
    z_dim, N = params["W1"].shape
    X_dim = params["W3"].shape[1]
    Np = _round_up(N, 128)       # lane-dense hidden dim
    Mp = _round_up(X_dim, 128)   # lane-dense output dim

    W2f = params["W2"].astype(jnp.float32)
    W3f = params["W3"].astype(jnp.float32)
    W23 = W2f @ W3f
    b23 = params["b2"].astype(jnp.float32) @ W3f + params["b3"].astype(jnp.float32)

    W1p = jnp.pad(params["W1"].astype(jnp.float32),
                  ((0, 0), (0, Np - N))).astype(mxu_dtype)
    b1p = jnp.pad(params["b1"].astype(jnp.float32), ((0, 0), (0, Np - N)))
    W23p = jnp.pad(W23, ((0, Np - N), (0, Mp - X_dim))).astype(mxu_dtype)
    b23p = jnp.pad(b23, ((0, 0), (0, Mp - X_dim)))

    return {"W1p": W1p, "b1p": b1p, "W23p": W23p, "b23p": b23p,
            "z_dim": z_dim, "N": N, "X_dim": X_dim, "Np": Np, "Mp": Mp,
            "mxu_dtype": mxu_dtype}


def pnet_forward(x, prep, *, batch_tile=512, out_dtype=jnp.float32):
    """x: (B, z_dim) in any float dtype; prep: output of prepare_params()."""
    B, z_dim = x.shape
    assert z_dim == prep["z_dim"]
    mxu_dtype = prep["mxu_dtype"]
    Np, Mp, X_dim = prep["Np"], prep["Mp"], prep["X_dim"]

    itemsize = jnp.dtype(mxu_dtype).itemsize
    out_itemsize = jnp.dtype(out_dtype).itemsize

    # ---- batch tile: sublane aligned, capped so the grid has >=2 steps ----
    sub = 16 if itemsize == 2 else 8
    tb_cap = _round_up(max(sub, -(-B // 2)), sub)
    TB = max(sub, min(_round_up(min(batch_tile, B), sub), tb_cap))
    Bp = _round_up(B, TB)

    # ---- output-column tile: keep resident W23 inside a VMEM budget (v7x) ----
    TM = Mp
    w23_budget = 24 << 20
    if Np * Mp * itemsize > w23_budget:
        TM = max(128, (w23_budget // (Np * itemsize)) // 128 * 128)
        while Mp % TM:
            TM -= 128

    # ---- x: single cast, batch pad only if needed, no K padding ----
    xm = x if x.dtype == mxu_dtype else x.astype(mxu_dtype)
    if Bp != B:
        xm = jnp.pad(xm, ((0, Bp - B), (0, 0)))

    grid = (Bp // TB, Mp // TM)

    # VMEM budget: weights (<=2 bufs) + biases + pipelined x/out tiles + headroom.
    vmem_limit = int(
        2 * (z_dim * Np + Np * TM) * itemsize
        + 2 * (Np + TM) * 4
        + 2 * (TB * z_dim * itemsize + TB * TM * out_itemsize)
    ) + (8 << 20)
    vmem_limit = min(vmem_limit, 128 << 20)

    cost = pl.CostEstimate(
        flops=2 * Bp * (z_dim * Np + Np * Mp),
        transcendentals=Bp * Mp,
        bytes_accessed=(Bp * z_dim * itemsize
                        + (z_dim * Np + Np * Mp) * itemsize
                        + (Np + Mp) * 4
                        + Bp * Mp * out_itemsize),
    )

    out_padded = pl.pallas_call(
        pnet_kernel,
        out_shape=jax.ShapeDtypeStruct((Bp, Mp), out_dtype),
        grid_spec=pl.GridSpec(
            grid=grid,
            in_specs=[
                pl.BlockSpec((TB, z_dim), lambda i, j: (i, 0)),   # x tile (pipelined)
                pl.BlockSpec((z_dim, Np), lambda i, j: (0, 0)),   # W1  (VMEM resident)
                pl.BlockSpec((1, Np),     lambda i, j: (0, 0)),   # b1
                pl.BlockSpec((Np, TM),    lambda i, j: (0, j)),   # W23 (col-tiled if huge)
                pl.BlockSpec((1, TM),     lambda i, j: (0, j)),   # b23
            ],
            out_specs=pl.BlockSpec((TB, TM), lambda i, j: (i, j)),
        ),
        compiler_params=pltpu.CompilerParams(
            dimension_semantics=("parallel", "parallel"),
            vmem_limit_bytes=vmem_limit,
        ),
        cost_estimate=cost,
    )(xm, prep["W1p"], prep["b1p"], prep["W23p"], prep["b23p"])

    if Bp == B and Mp == X_dim:
        return out_padded
    return out_padded[:B, :X_dim]


def init_params(key, z_dim, N, X_dim):
    """Deterministic init matching nn.Linear's U(-1/sqrt(fan_in), 1/sqrt(fan_in))."""
    ks = jax.random.split(key, 6)

    def linear(kw, kb, fan_in, fan_out):
        bound = 1.0 / jnp.sqrt(jnp.float32(fan_in))
        W = jax.random.uniform(kw, (fan_in, fan_out), jnp.float32, -bound, bound)
        b = jax.random.uniform(kb, (1, fan_out), jnp.float32, -bound, bound)
        return W, b

    W1, b1 = linear(ks[0], ks[1], z_dim, N)
    W2, b2 = linear(ks[2], ks[3], N, N)
    W3, b3 = linear(ks[4], ks[5], N, X_dim)
    return {"W1": W1, "b1": b1, "W2": W2, "b2": b2, "W3": W3, "b3": b3}


def pnet_reference(x, p):
    h = jnp.maximum(x @ p["W1"] + p["b1"], 0.0)       # lin1 + dropout(id) + relu
    h = h @ p["W2"] + p["b2"]                          # lin2 + dropout(id)
    return jnp.tanh(h @ p["W3"] + p["b3"])             # lin3 + tanh


if __name__ == "__main__":
    key = jax.random.PRNGKey(0)
    k_x, k_p = jax.random.split(key)

    B, z_dim, N, X_dim = 16, 16, 32, 64
    x = jax.random.normal(k_x, (B, z_dim), jnp.float32)
    params = init_params(k_p, z_dim, N, X_dim)
    ref = pnet_reference(x, params)

    # f32 MXU path: tight tolerance vs. reference; batch_tile=8 -> grid=(2,1)
    prep_f32 = prepare_params(params, mxu_dtype=jnp.float32)
    out = pnet_forward(x, prep_f32, batch_tile=8)
    jax.block_until_ready(out)
    assert out.shape == (B, X_dim)
    assert jnp.allclose(out, ref, atol=5e-5, rtol=5e-5)

    # bf16 MXU path (recommended default on v6e/v7x): looser tolerance because
    # the folded W23 is quantized differently than the reference's two matmuls.
    prep_bf16 = prepare_params(params, mxu_dtype=jnp.bfloat16)
    out_bf = pnet_forward(x, prep_bf16, out_dtype=jnp.bfloat16)
    jax.block_until_ready(out_bf)
    assert out_bf.shape == (B, X_dim)
    assert jnp.allclose(out_bf.astype(jnp.float32), ref, atol=5e-2, rtol=5e-2)

    print("KERNEL_OK")
</pallas_src>

<mosaic_0001>
module attributes {stable_mosaic.version = 11 : i64} {
  func.func @pnet_kernel(%arg0: i32, %arg1: i32, %arg2: memref<8x16xf32, #tpu.memory_space<vmem>>, %arg3: memref<16x128xf32, #tpu.memory_space<vmem>>, %arg4: memref<1x128xf32, #tpu.memory_space<vmem>>, %arg5: memref<128x128xf32, #tpu.memory_space<vmem>>, %arg6: memref<1x128xf32, #tpu.memory_space<vmem>>, %arg7: memref<8x128xf32, #tpu.memory_space<vmem>>) attributes {dimension_semantics = [#tpu.dimension_semantics<parallel>, #tpu.dimension_semantics<parallel>], iteration_bounds = array<i64: 2, 1>, scalar_prefetch = 0 : i64, scratch_operands = 0 : i64, tpu.core_type = #tpu.core_type<tc>, window_params = [{transform_indices = @transform_0, window_bounds = array<i64: 8, 16>}, {pipeline_mode = #tpu.pipeline_mode<synchronous>, transform_indices = @transform_1, window_bounds = array<i64: 16, 128>}, {pipeline_mode = #tpu.pipeline_mode<synchronous>, transform_indices = @transform_2, window_bounds = array<i64: 1, 128>}, {transform_indices = @transform_3, window_bounds = array<i64: 128, 128>}, {transform_indices = @transform_4, window_bounds = array<i64: 1, 128>}, {transform_indices = @transform_5, window_bounds = array<i64: 8, 128>}]} {
    %c0 = arith.constant 0 : index
    %c0_0 = arith.constant 0 : index
    %0 = vector.load %arg2[%c0, %c0_0] : memref<8x16xf32, #tpu.memory_space<vmem>>, vector<8x16xf32>
    %c0_1 = arith.constant 0 : index
    %c0_2 = arith.constant 0 : index
    %1 = vector.load %arg3[%c0_1, %c0_2] : memref<16x128xf32, #tpu.memory_space<vmem>>, vector<16x128xf32>
    %cst = arith.constant dense<0.000000e+00> : vector<8x128xf32>
    %2 = tpu.matmul %0, %1, %cst {dimension_numbers = #tpu.dot_dimension_numbers<[1], [0], [0], [1], [0, 0, 1, 1], [], []>} : vector<8x16xf32>, vector<16x128xf32>, vector<8x128xf32> -> vector<8x128xf32>
    %c0_3 = arith.constant 0 : index
    %c0_4 = arith.constant 0 : index
    %3 = vector.load %arg4[%c0_3, %c0_4] : memref<1x128xf32, #tpu.memory_space<vmem>>, vector<1x128xf32>
    %4 = vector.broadcast %3 : vector<1x128xf32> to vector<8x128xf32>
    %5 = arith.addf %2, %4 : vector<8x128xf32>
    %cst_5 = arith.constant 0.000000e+00 : f32
    %6 = vector.broadcast %cst_5 : f32 to vector<8x128xf32>
    %7 = arith.maximumf %5, %6 : vector<8x128xf32>
    %c0_6 = arith.constant 0 : index
    %c0_7 = arith.constant 0 : index
    %8 = vector.load %arg5[%c0_6, %c0_7] : memref<128x128xf32, #tpu.memory_space<vmem>>, vector<128x128xf32>
    %cst_8 = arith.constant dense<0.000000e+00> : vector<8x128xf32>
    %9 = tpu.matmul %7, %8, %cst_8 {dimension_numbers = #tpu.dot_dimension_numbers<[1], [0], [0], [1], [0, 0, 1, 1], [], []>} : vector<8x128xf32>, vector<128x128xf32>, vector<8x128xf32> -> vector<8x128xf32>
    %c0_9 = arith.constant 0 : index
    %c0_10 = arith.constant 0 : index
    %10 = vector.load %arg6[%c0_9, %c0_10] : memref<1x128xf32, #tpu.memory_space<vmem>>, vector<1x128xf32>
    %11 = vector.broadcast %10 : vector<1x128xf32> to vector<8x128xf32>
    %12 = arith.addf %9, %11 : vector<8x128xf32>
    %13 = math.tanh %12 : vector<8x128xf32>
    %c0_11 = arith.constant 0 : index
    %c0_12 = arith.constant 0 : index
    %14 = vector.load %arg7[%c0_11, %c0_12] : memref<8x128xf32, #tpu.memory_space<vmem>>, vector<8x128xf32>
    tpu.vector_store %arg7[%c0_11, %c0_12], %13 {strides = array<i32>} : memref<8x128xf32, #tpu.memory_space<vmem>>, vector<8x128xf32>,
    return
  }
  func.func @transform_0(%arg0: i32, %arg1: i32) -> (i32, i32) {
    %c0_i32 = arith.constant 0 : i32
    %c0_i32_0 = arith.constant 0 : i32
    return %arg0, %c0_i32 : i32, i32
  }
  func.func @transform_1(%arg0: i32, %arg1: i32) -> (i32, i32) {
    %c0_i32 = arith.constant 0 : i32
    %c0_i32_0 = arith.constant 0 : i32
    %c0_i32_1 = arith.constant 0 : i32
    return %c0_i32, %c0_i32_0 : i32, i32
  }
  func.func @transform_2(%arg0: i32, %arg1: i32) -> (i32, i32) {
    %c0_i32 = arith.constant 0 : i32
    %c0_i32_0 = arith.constant 0 : i32
    %c0_i32_1 = arith.constant 0 : i32
    return %c0_i32, %c0_i32_0 : i32, i32
  }
  func.func @transform_3(%arg0: i32, %arg1: i32) -> (i32, i32) {
    %c0_i32 = arith.constant 0 : i32
    %c0_i32_0 = arith.constant 0 : i32
    return %c0_i32, %arg1 : i32, i32
  }
  func.func @transform_4(%arg0: i32, %arg1: i32) -> (i32, i32) {
    %c0_i32 = arith.constant 0 : i32
    %c0_i32_0 = arith.constant 0 : i32
    return %c0_i32, %arg1 : i32, i32
  }
  func.func @transform_5(%arg0: i32, %arg1: i32) -> (i32, i32) {
    %c0_i32 = arith.constant 0 : i32
    return %arg0, %arg1 : i32, i32
  }
}

</mosaic_0001>

<llo_original>
// kernel: tpu_custom_call.1
$region0: #{tpu_custom_call.1}
  #allocation0 [shape = 'u32[]', space=smem, size = 0x4, offset = 0x4, fixed_abs, tag = 'smem constant byte address 0x4 - core index']
  #allocation1 [shape = 'u32[144,128]{1,0:T(1,128)}', space=vmem, size = 0x12000, scoped, tag = 'internal scratch']
  %s0 = inlined_call_operand.hbm [shape: f32[16,16], index: 0, kind: input, shape index: {}]
  %s1 = inlined_call_operand.hbm [shape: f32[16,128], index: 1, kind: input, shape index: {}]
  %s2 = inlined_call_operand.vmem [shape: f32[1,128], index: 2, kind: input, shape index: {}]
  %s3 = inlined_call_operand.hbm [shape: f32[128,128], index: 3, kind: input, shape index: {}]
  %s4 = inlined_call_operand.vmem [shape: f32[1,128], index: 4, kind: input, shape index: {}]
  %s5 = inlined_call_operand.hbm [shape: f32[16,128], index: 5, kind: output, shape index: {}]
  %s6 = sld [smem:[#allocation0]]
  $region65: #{tpu_custom_call.1} parent=0
    _
  %s8 = ssub.s32 1, %s6
  %s9 = scalar_select 0, %s8, %s6
  $region1: #{tpu_custom_call.1} parent=0
    #allocation2 [shape = 'u8[8192]{0}', space=vmem, size = 0x2000, scoped, tag = 'input window, operand 0']
    #allocation3 [shape = 's32[2]{0}', space=sflag, size = 0x8, scoped, tag = 'scoped memory for tpu_custom_call.1']
    #allocation4 [shape = 's32[2]{0}', space=sflag, size = 0x8, scoped, tag = 'scoped memory for tpu_custom_call.1']
    #allocation5 [shape = 'u8[8192]{0}', space=vmem, size = 0x2000, scoped, tag = 'input window, operand 1, single buffered']
    #allocation6 [shape = 's32[1]{0}', space=sflag, size = 0x4, scoped, tag = 'scoped memory for tpu_custom_call.1']
    #allocation7 [shape = 'u8[65536]{0}', space=vmem, size = 0x10000, scoped, tag = 'input window, operand 3, single buffered']
    #allocation8 [shape = 'u8[8192]{0}', space=vmem, size = 0x2000, scoped, tag = 'output window, operand 0']
    %10 = vsyncpa [#allocation3], 0
    %s11 = scalar_lea.sflag [#allocation3], 1
    %12 = vsyncpa %s11, 0
    %13 = vsyncpa [#allocation6], 0
    %14 = vsyncpa [#allocation4], 0
    %s15 = scalar_lea.sflag [#allocation4], 1
    %16 = vsyncpa %s15, 0
    loop: start=0, step=1, limit=4
    $region2: #{tpu_custom_call.1} parent=1 // loop_pre_header
      _
    $region3: #{tpu_custom_call.1} parent=1 // loop_header
      %s18 = sphi 0, %s22
      %p19 = scmp.ge.s32.totalorder %s18, 4
      %s25 = sphi 0, %s37
      %s26 = sphi 0, %s33
      %s27 = sphi 0, %s25
      %s28 = sphi 0, %s26
      %s29 = sphi 0, %s27
      %s30 = sphi 0, %s28
      %s40 = sphi 0, %s42
      %s43 = sphi 0, %s40
      %s44 = sphi 0, %s43
      %s60 = sphi 0, %s44
      %s64 = sphi 0, %s64
      %s66 = sphi 0, %s64
      %s67 = sphi 0, %s66
      %s81 = sphi 0, %s67
      %s85 = sphi 0, %s85
      %s87 = sphi 0, %s85
      %s88 = sphi 0, %s87
      %s102 = sphi 0, %s88
      %s108 = sphi 0, %s110
      %s111 = sphi 0, %s108
      %s112 = sphi 0, %s111
      %s128 = sphi 0, %s112
      %s134 = sphi 0, %s136
      %s137 = sphi 0, %s134
      %s138 = sphi 0, %s137
      %s154 = sphi 0, %s138
      %s162 = sphi 0, %s164
      %s165 = sphi 0, %s162
      %s166 = sphi 0, %s165
      %s182 = sphi 0, %s166
    $region4: #{tpu_custom_call.1} parent=1 // loop_header_branch
      %21 = sbr.rel (%p19) target = $region8
    $region5: #{tpu_custom_call.1} parent=1 // loop_body
      %s23 = ssub.s32 %s18, 1
      %s24 = ssub.s32 %s18, 2
      %s31 = sadd.s32 1, %s26
      %p32 = scmp.ge.s32.totalorder %s31, 1
      %s33 = scalar_select %p32, 0, %s31
      %s34 = sadd.s32 1, %s25
      %s35 = scalar_select %p32, %s34, %s25
      %p36 = scmp.ge.s32.totalorder %s35, 2
      %s37 = scalar_select %p36, 0, %s35
      %s38 = ssub.s32 %s25, %s37
      %p39 = scmp.eq.s32.totalorder %s38, 0
      %s41 = sadd.s32 %s40, 1
      %s42 = scalar_select %p39, %s40, %s41
      %p45 = pneg %p39
      %p46 = scmp.eq.s32.totalorder %s18, 1
      %p47 = por %p45, %p46
      %p48 = scmp.ne.s32.totalorder %s40, %s43
      %p49 = scmp.eq.s32.totalorder %s18, 0
      %p50 = por %p48, %p49
      %p51 = scmp.ne.s32.totalorder %s40, %s43
      %p52 = scmp.eq.s32.totalorder %s23, 1
      %p53 = por %p51, %p52
      %p54 = scmp.ne.s32.totalorder %s43, %s44
      %p55 = scmp.eq.s32.totalorder %s23, 0
      %p56 = por %p54, %p55
      %p57 = scmp.ne.s32.totalorder %s43, %s44
      %p58 = scmp.eq.s32.totalorder %s24, 1
      %p59 = por %p57, %p58
      %p61 = scmp.ne.s32.totalorder %s44, %s60
      %p62 = scmp.eq.s32.totalorder %s24, 0
      %p63 = por %p61, %p62
      %s65 = sadd.s32 %s64, 1
      %p68 = scmp.eq.s32.totalorder %s18, 1
      %p69 = scmp.ne.s32.totalorder %s64, %s66
      %p70 = scmp.eq.s32.totalorder %s18, 0
      %p71 = por %p69, %p70
      %p72 = scmp.ne.s32.totalorder %s64, %s66
      %p73 = scmp.eq.s32.totalorder %s23, 1
      %p74 = por %p72, %p73
      %p75 = scmp.ne.s32.totalorder %s66, %s67
      %p76 = scmp.eq.s32.totalorder %s23, 0
      %p77 = por %p75, %p76
      %p78 = scmp.ne.s32.totalorder %s66, %s67
      %p79 = scmp.eq.s32.totalorder %s24, 1
      %p80 = por %p78, %p79
      %p82 = scmp.ne.s32.totalorder %s67, %s81
      %p83 = scmp.eq.s32.totalorder %s24, 0
      %p84 = por %p82, %p83
      %s86 = sadd.s32 %s85, 1
      %p89 = scmp.eq.s32.totalorder %s18, 1
      %p90 = scmp.ne.s32.totalorder %s85, %s87
      %p91 = scmp.eq.s32.totalorder %s18, 0
      %p92 = por %p90, %p91
      %p93 = scmp.ne.s32.totalorder %s85, %s87
      %p94 = scmp.eq.s32.totalorder %s23, 1
      %p95 = por %p93, %p94
      %p96 = scmp.ne.s32.totalorder %s87, %s88
      %p97 = scmp.eq.s32.totalorder %s23, 0
      %p98 = por %p96, %p97
      %p99 = scmp.ne.s32.totalorder %s87, %s88
      %p100 = scmp.eq.s32.totalorder %s24, 1
      %p101 = por %p99, %p100
      %p103 = scmp.ne.s32.totalorder %s88, %s102
      %p104 = scmp.eq.s32.totalorder %s24, 0
      %p105 = por %p103, %p104
      %s106 = ssub.s32 %s26, %s33
      %p107 = scmp.eq.s32.totalorder %s106, 0
      %s109 = sadd.s32 %s108, 1
      %s110 = scalar_select %p107, %s108, %s109
      %p113 = pneg %p107
      %p114 = scmp.eq.s32.totalorder %s18, 1
      %p115 = por %p113, %p114
      %p116 = scmp.ne.s32.totalorder %s108, %s111
      %p117 = scmp.eq.s32.totalorder %s18, 0
      %p118 = por %p116, %p117
      %p119 = scmp.ne.s32.totalorder %s108, %s111
      %p120 = scmp.eq.s32.totalorder %s23, 1
      %p121 = por %p119, %p120
      %p122 = scmp.ne.s32.totalorder %s111, %s112
      %p123 = scmp.eq.s32.totalorder %s23, 0
      %p124 = por %p122, %p123
      %p125 = scmp.ne.s32.totalorder %s111, %s112
      %p126 = scmp.eq.s32.totalorder %s24, 1
      %p127 = por %p125, %p126
      %p129 = scmp.ne.s32.totalorder %s112, %s128
      %p130 = scmp.eq.s32.totalorder %s24, 0
      %p131 = por %p129, %p130
      %s132 = ssub.s32 %s26, %s33
      %p133 = scmp.eq.s32.totalorder %s132, 0
      %s135 = sadd.s32 %s134, 1
      %s136 = scalar_select %p133, %s134, %s135
      %p139 = pneg %p133
      %p140 = scmp.eq.s32.totalorder %s18, 1
      %p141 = por %p139, %p140
      %p142 = scmp.ne.s32.totalorder %s134, %s137
      %p143 = scmp.eq.s32.totalorder %s18, 0
      %p144 = por %p142, %p143
      %p145 = scmp.ne.s32.totalorder %s134, %s137
      %p146 = scmp.eq.s32.totalorder %s23, 1
      %p147 = por %p145, %p146
      %p148 = scmp.ne.s32.totalorder %s137, %s138
      %p149 = scmp.eq.s32.totalorder %s23, 0
      %p150 = por %p148, %p149
      %p151 = scmp.ne.s32.totalorder %s137, %s138
      %p152 = scmp.eq.s32.totalorder %s24, 1
      %p153 = por %p151, %p152
      %p155 = scmp.ne.s32.totalorder %s138, %s154
      %p156 = scmp.eq.s32.totalorder %s24, 0
      %p157 = por %p155, %p156
      %s158 = ssub.s32 %s25, %s37
      %s159 = ssub.s32 %s26, %s33
      %s160 = sor.u32 %s158, %s159
      %p161 = scmp.eq.s32.totalorder %s160, 0
      %s163 = sadd.s32 %s162, 1
      %s164 = scalar_select %p161, %s162, %s163
      %p167 = pneg %p161
      %p168 = scmp.eq.s32.totalorder %s18, 1
      %p169 = por %p167, %p168
      %p170 = scmp.ne.s32.totalorder %s162, %s165
      %p171 = scmp.eq.s32.totalorder %s18, 0
      %p172 = por %p170, %p171
      %p173 = scmp.ne.s32.totalorder %s162, %s165
      %p174 = scmp.eq.s32.totalorder %s23, 1
      %p175 = por %p173, %p174
      %p176 = scmp.ne.s32.totalorder %s165, %s166
      %p177 = scmp.eq.s32.totalorder %s23, 0
      %p178 = por %p176, %p177
      %p179 = scmp.ne.s32.totalorder %s165, %s166
      %p180 = scmp.eq.s32.totalorder %s24, 1
      %p181 = por %p179, %p180
      %p183 = scmp.ne.s32.totalorder %s166, %s182
      %p184 = scmp.eq.s32.totalorder %s24, 0
      %p185 = por %p183, %p184
      %p186 = scmp.le.s32.totalorder 1, %s18
      %p187 = scmp.lt.s32.totalorder %s18, 3
      %p188 = pnand %p186, %p187
      %p189 = pneg %p188
      // Predicated region
      $region9: #{tpu_custom_call.1} parent=5 // pred_check
        _
      $region10: #{tpu_custom_call.1} parent=5 // pred_check_branch
        %191 = sbr.rel (%p188) target = $region12
      $region11: #{tpu_custom_call.1} parent=5 // pred_region
        %s192 = ssub.s32 %s18, 1
        // Predicated region
        $region13: #{tpu_custom_call.1} parent=11 // pred_check
          %p193 = pneg %p77
        $region14: #{tpu_custom_call.1} parent=11 // pred_check_branch
          %195 = sbr.rel (%p193) target = $region16
        $region15: #{tpu_custom_call.1} parent=11 // pred_region
          %s197 = ssub.s32 256, 256
          %198 = vsyncadd [#allocation6], %s197
          %s199 = sshll.u32 [#allocation5], 4
          %s200 = int_to_ptr.vmem [resolvable:$true] %s199
          %205 = dma.hbm_to_vmem [thread:$0]  %s1, 256, %s200, [#allocation6], 128, 128, 8
        $region16: #{tpu_custom_call.1} parent=11 // pred_fallthru
          _
        // Predicated region
        $region17: #{tpu_custom_call.1} parent=11 // pred_check
          %p206 = pneg %p98
        $region18: #{tpu_custom_call.1} parent=11 // pred_check_branch
          %208 = sbr.rel (%p206) target = $region20
        $region19: #{tpu_custom_call.1} parent=11 // pred_region
          _
        $region20: #{tpu_custom_call.1} parent=11 // pred_fallthru
          _
        // Predicated region
        $region21: #{tpu_custom_call.1} parent=11 // pred_check
          %p209 = pneg %p124
        $region22: #{tpu_custom_call.1} parent=11 // pred_check_branch
          %211 = sbr.rel (%p209) target = $region24
        $region23: #{tpu_custom_call.1} parent=11 // pred_region
          %s213 = ssub.s32 2048, 2048
          %214 = vsyncadd [#allocation6], %s213
          %s215 = smul.addr %s28, 128
          %s216 = scalar_lea.hbm %s3, %s215
          %s217 = sshll.u32 [#allocation7], 4
          %s218 = int_to_ptr.vmem [resolvable:$true] %s217
          %223 = dma.hbm_to_vmem [thread:$0]  %s216, 2048, %s218, [#allocation6], 128, 128, 8
        $region24: #{tpu_custom_call.1} parent=11 // pred_fallthru
          _
        // Predicated region
        $region25: #{tpu_custom_call.1} parent=11 // pred_check
          %p224 = pneg %p150
        $region26: #{tpu_custom_call.1} parent=11 // pred_check_branch
          %226 = sbr.rel (%p224) target = $region28
        $region27: #{tpu_custom_call.1} parent=11 // pred_region
          %p227 = scmp.lt.s32.totalorder %s28, 0
          %s228 = scalar_select %p227, %s28, 0
          %s229 = scalar_lea.vmem %s4, %s228
        $region28: #{tpu_custom_call.1} parent=11 // pred_fallthru
          _
      $region12: #{tpu_custom_call.1} parent=5 // pred_fallthru
        _
      %p230 = scmp.lt.s32.totalorder %s18, 2
      // Predicated region
      $region29: #{tpu_custom_call.1} parent=5 // pred_check
        %p231 = pneg %p230
      $region30: #{tpu_custom_call.1} parent=5 // pred_check_branch
        %233 = sbr.rel (%p231) target = $region32
      $region31: #{tpu_custom_call.1} parent=5 // pred_region
        // Predicated region
        $region33: #{tpu_custom_call.1} parent=31 // pred_check
          %p234 = pneg %p50
        $region34: #{tpu_custom_call.1} parent=31 // pred_check_branch
          %236 = sbr.rel (%p234) target = $region36
        $region35: #{tpu_custom_call.1} parent=31 // pred_region
          %s237 = sand.u32 %s40, 1
          %s238 = scalar_lea.sflag [#allocation3], %s237
          %s239 = sand.u32 %s40, 1
          %s240 = smul.addr %s239, 8
          %s241 = scalar_lea.vmem [#allocation2], %s240
          %s243 = ssub.s32 128, 128
          %244 = vsyncadd %s238, %s243
          %s245 = smul.addr %s25, 128
          %s246 = scalar_lea.hbm %s0, %s245
          %s248 = sshll.u32 %s241, 4
          %s249 = int_to_ptr.vmem [resolvable:$true] %s248
          %251 = dma.hbm_to_vmem [thread:$0]  %s246, 128, %s249, %s238
        $region36: #{tpu_custom_call.1} parent=31 // pred_fallthru
          _
      $region32: #{tpu_custom_call.1} parent=5 // pred_fallthru
        _
      %p252 = scmp.le.s32.totalorder 1, %s18
      %p253 = scmp.lt.s32.totalorder %s18, 3
      %p254 = pnand %p252, %p253
      %p255 = pneg %p254
      // Predicated region
      $region37: #{tpu_custom_call.1} parent=5 // pred_check
        _
      $region38: #{tpu_custom_call.1} parent=5 // pred_check_branch
        %257 = sbr.rel (%p254) target = $region40
      $region39: #{tpu_custom_call.1} parent=5 // pred_region
        %s258 = ssub.s32 %s18, 1
        %s259 = sand.u32 %s43, 1
        %s260 = scalar_lea.sflag [#allocation3], %s259
        %s261 = sand.u32 %s43, 1
        %s262 = smul.addr %s261, 8
        %s263 = scalar_lea.vmem [#allocation2], %s262
        // Predicated region
        $region41: #{tpu_custom_call.1} parent=39 // pred_check
          %p264 = pneg %p56
        $region42: #{tpu_custom_call.1} parent=39 // pred_check_branch
          %266 = sbr.rel (%p264) target = $region44
        $region43: #{tpu_custom_call.1} parent=39 // pred_region
          %267 = dma.done %s260, 128
        $region44: #{tpu_custom_call.1} parent=39 // pred_fallthru
          _
        // Predicated region
        $region45: #{tpu_custom_call.1} parent=39 // pred_check
          %p268 = pneg %p77
        $region46: #{tpu_custom_call.1} parent=39 // pred_check_branch
          %270 = sbr.rel (%p268) target = $region48
        $region47: #{tpu_custom_call.1} parent=39 // pred_region
          %271 = dma.done [#allocation6], 256
        $region48: #{tpu_custom_call.1} parent=39 // pred_fallthru
          _
        // Predicated region
        $region49: #{tpu_custom_call.1} parent=39 // pred_check
          %p272 = pneg %p124
        $region50: #{tpu_custom_call.1} parent=39 // pred_check_branch
          %274 = sbr.rel (%p272) target = $region52
        $region51: #{tpu_custom_call.1} parent=39 // pred_region
          %275 = dma.done [#allocation6], 2048
        $region52: #{tpu_custom_call.1} parent=39 // pred_fallthru
          _
        %s276 = sand.u32 %s43, 1
        %s277 = scalar_lea.sflag [#allocation3], %s276
        %s278 = sand.u32 %s43, 1
        %s279 = smul.addr %s278, 8
        %s280 = scalar_lea.vmem [#allocation2], %s279
        %p281 = pneg %p56
        %p282 = pneg %p53
        %p283 = pneg %p77
        %p284 = pneg %p74
        %p285 = pneg %p98
        %p286 = pneg %p95
        %p287 = pneg %p124
        %p288 = pneg %p121
        %p289 = scmp.lt.s32.totalorder %s28, 0
        %s290 = scalar_select %p289, %s28, 0
        %s291 = scalar_lea.vmem %s4, %s290
        %p292 = pneg %p150
        %p293 = pneg %p147
        %p294 = pneg %p178
        %p295 = pneg %p175
        %s296 = sand.u32 %s165, 1
        %s297 = scalar_lea.sflag [#allocation4], %s296
        %s298 = sand.u32 %s165, 1
        %s299 = smul.addr %s298, 8
        %s300 = scalar_lea.vmem [#allocation8], %s299
        %p301 = scmp.lt.s32.totalorder %s28, 0
        %s302 = scalar_select %p301, %s28, 0
        %s303 = scalar_lea.vmem %s4, %s302
        %v304 = vld [vmem:[%s263] sm:$0xff]
        %v305 = vld [vmem:[#allocation5] sm:$0xff]
        %v306 = vld [vmem:[#allocation5 + $0x8] sm:$0xff]
        %v307 = vld [vmem:[%s2] sm:$0x1]
        %v309 = vlaneseq
        %v310 = vshrl.u32 %v309, 7
        %v311 = vsub.s32 0, %v310
        %v312 = vrot.slane %v307, %v311
        %vm314 = vcmask 130048
        %v316 = vsel %vm314, %v304, 0
        %318 = vmatprep.subr.mxu0 0.0
        %319 = vmatpush1.msra.mxu0 0.0
        %320 = vmatprep.subr.mxu0 0.0
        %321 = vmatpush1.msra.mxu0 0.0
        %322 = vmatprep.subr.mxu0 0.0
        %323 = vmatpush1.msra.mxu0 0.0
        %324 = vmatprep.subr.mxu0 0.0
        %325 = vmatpush1.msra.mxu0 0.0
        %326 = vmatprep.subr.mxu0 0.0
        %327 = vmatpush1.msra.mxu0 0.0
        %328 = vmatprep.subr.mxu0 0.0
        %329 = vmatpush1.msra.mxu0 0.0
        %330 = vmatprep.subr.mxu0 0.0
        %331 = vmatpush1.msra.mxu0 0.0
        %332 = vmatprep.subr.mxu0 0.0
        %333 = vmatpush1.msra.mxu0 0.0
        %334 = vmatprep.subr.mxu0 0.0
        %335 = vmatpush1.msra.mxu0 0.0
        %336 = vmatprep.subr.mxu0 0.0
        %337 = vmatpush1.msra.mxu0 0.0
        %338 = vmatprep.subr.mxu0 0.0
        %339 = vmatpush1.msra.mxu0 0.0
        %340 = vmatprep.subr.mxu0 0.0
        %341 = vmatpush1.msra.mxu0 0.0
        %342 = vmatprep.subr.mxu0 0.0
        %343 = vmatpush1.msra.mxu0 0.0
        %344 = vmatprep.subr.mxu0 0.0
        %345 = vmatpush1.msra.mxu0 0.0
        %346 = vmatprep.subr.mxu0 0.0
        %347 = vmatpush1.msra.mxu0 %v306
        %348 = vmatprep.subr.mxu0 0.0
        %349 = vmatpush1.msra.mxu0 %v305
        %350 = vmatprep.subr.mxu0 0.0
        %351 = vmatpush2.msra.mxu0 0.0
        %352 = vmatprep.subr.mxu0 0.0
        %353 = vmatpush2.msra.mxu0 0.0
        %354 = vmatprep.subr.mxu0 0.0
        %355 = vmatpush2.msra.mxu0 0.0
        %356 = vmatprep.subr.mxu0 0.0
        %357 = vmatpush2.msra.mxu0 0.0
        %358 = vmatprep.subr.mxu0 0.0
        %359 = vmatpush2.msra.mxu0 0.0
        %360 = vmatprep.subr.mxu0 0.0
        %361 = vmatpush2.msra.mxu0 0.0
        %362 = vmatprep.subr.mxu0 0.0
        %363 = vmatpush2.msra.mxu0 0.0
        %364 = vmatprep.subr.mxu0 0.0
        %365 = vmatpush2.msra.mxu0 0.0
        %366 = vmatprep.subr.mxu0 0.0
        %367 = vmatpush2.msra.mxu0 0.0
        %368 = vmatprep.subr.mxu0 0.0
        %369 = vmatpush2.msra.mxu0 0.0
        %370 = vmatprep.subr.mxu0 0.0
        %371 = vmatpush2.msra.mxu0 0.0
        %372 = vmatprep.subr.mxu0 0.0
        %373 = vmatpush2.msra.mxu0 0.0
        %374 = vmatprep.subr.mxu0 0.0
        %375 = vmatpush2.msra.mxu0 0.0
        %376 = vmatprep.subr.mxu0 0.0
        %377 = vmatpush2.msra.mxu0 0.0
        %378 = vmatprep.subr.mxu0 0.0
        %379 = vmatpush2.msra.mxu0 0.0
        %380 = vmatprep.subr.mxu0 0.0
        %381 = vmatpush2.msra.mxu0 0.0
        %382 = vmatprep.mubr.f32.mxu0 0.0
        %383 = vmatmul.mubr.f32.gmra.mxu0 %v316
        %v384 = vpop.f32.mrf.mxu0
        %v385 = vadd.f32 %v312, %v384
        %v386 = vpop.f32.mrf.mxu0
        %387 = vdwg.mxu0
        %v388 = vmax.f32 %v385, 0.0
        %v389 = vld [vmem:[#allocation7] sm:$0xff]
        %v390 = vld [vmem:[#allocation7 + $0x8] sm:$0xff]
        %v391 = vld [vmem:[#allocation7 + $0x10] sm:$0xff]
        %v392 = vld [vmem:[#allocation7 + $0x18] sm:$0xff]
        %v393 = vld [vmem:[#allocation7 + $0x20] sm:$0xff]
        %v394 = vld [vmem:[#allocation7 + $0x28] sm:$0xff]
        %v395 = vld [vmem:[#allocation7 + $0x30] sm:$0xff]
        %v396 = vld [vmem:[#allocation7 + $0x38] sm:$0xff]
        %v397 = vld [vmem:[#allocation7 + $0x40] sm:$0xff]
        %v398 = vld [vmem:[#allocation7 + $0x48] sm:$0xff]
        %v399 = vld [vmem:[#allocation7 + $0x50] sm:$0xff]
        %v400 = vld [vmem:[#allocation7 + $0x58] sm:$0xff]
        %v401 = vld [vmem:[#allocation7 + $0x60] sm:$0xff]
        %v402 = vld [vmem:[#allocation7 + $0x68] sm:$0xff]
        %v403 = vld [vmem:[#allocation7 + $0x70] sm:$0xff]
        %v404 = vld [vmem:[#allocation7 + $0x78] sm:$0xff]
        %v405 = vld [vmem:[%s303] sm:$0x1]
        %v407 = vlaneseq
        %v408 = vshrl.u32 %v407, 7
        %v409 = vsub.s32 0, %v408
        %v410 = vrot.slane %v405, %v409
        %412 = vmatprep.subr.mxu0 0.0
        %413 = vmatpush1.msra.mxu0 %v404
        %414 = vmatprep.subr.mxu0 0.0
        %415 = vmatpush1.msra.mxu0 %v403
        %416 = vmatprep.subr.mxu0 0.0
        %417 = vmatpush1.msra.mxu0 %v402
        %418 = vmatprep.subr.mxu0 0.0
        %419 = vmatpush1.msra.mxu0 %v401
        %420 = vmatprep.subr.mxu0 0.0
        %421 = vmatpush1.msra.mxu0 %v400
        %422 = vmatprep.subr.mxu0 0.0
        %423 = vmatpush1.msra.mxu0 %v399
        %424 = vmatprep.subr.mxu0 0.0
        %425 = vmatpush1.msra.mxu0 %v398
        %426 = vmatprep.subr.mxu0 0.0
        %427 = vmatpush1.msra.mxu0 %v397
        %428 = vmatprep.subr.mxu0 0.0
        %429 = vmatpush1.msra.mxu0 %v396
        %430 = vmatprep.subr.mxu0 0.0
        %431 = vmatpush1.msra.mxu0 %v395
        %432 = vmatprep.subr.mxu0 0.0
        %433 = vmatpush1.msra.mxu0 %v394
        %434 = vmatprep.subr.mxu0 0.0
        %435 = vmatpush1.msra.mxu0 %v393
        %436 = vmatprep.subr.mxu0 0.0
        %437 = vmatpush1.msra.mxu0 %v392
        %438 = vmatprep.subr.mxu0 0.0
        %439 = vmatpush1.msra.mxu0 %v391
        %440 = vmatprep.subr.mxu0 0.0
        %441 = vmatpush1.msra.mxu0 %v390
        %442 = vmatprep.subr.mxu0 0.0
        %443 = vmatpush1.msra.mxu0 %v389
        %444 = vmatprep.subr.mxu0 0.0
        %445 = vmatpush2.msra.mxu0 0.0
        %446 = vmatprep.subr.mxu0 0.0
        %447 = vmatpush2.msra.mxu0 0.0
        %448 = vmatprep.subr.mxu0 0.0
        %449 = vmatpush2.msra.mxu0 0.0
        %450 = vmatprep.subr.mxu0 0.0
        %451 = vmatpush2.msra.mxu0 0.0
        %452 = vmatprep.subr.mxu0 0.0
        %453 = vmatpush2.msra.mxu0 0.0
        %454 = vmatprep.subr.mxu0 0.0
        %455 = vmatpush2.msra.mxu0 0.0
        %456 = vmatprep.subr.mxu0 0.0
        %457 = vmatpush2.msra.mxu0 0.0
        %458 = vmatprep.subr.mxu0 0.0
        %459 = vmatpush2.msra.mxu0 0.0
        %460 = vmatprep.subr.mxu0 0.0
        %461 = vmatpush2.msra.mxu0 0.0
        %462 = vmatprep.subr.mxu0 0.0
        %463 = vmatpush2.msra.mxu0 0.0
        %464 = vmatprep.subr.mxu0 0.0
        %465 = vmatpush2.msra.mxu0 0.0
        %466 = vmatprep.subr.mxu0 0.0
        %467 = vmatpush2.msra.mxu0 0.0
        %468 = vmatprep.subr.mxu0 0.0
        %469 = vmatpush2.msra.mxu0 0.0
        %470 = vmatprep.subr.mxu0 0.0
        %471 = vmatpush2.msra.mxu0 0.0
        %472 = vmatprep.subr.mxu0 0.0
        %473 = vmatpush2.msra.mxu0 0.0
        %474 = vmatprep.subr.mxu0 0.0
        %475 = vmatpush2.msra.mxu0 0.0
        %476 = vmatprep.mubr.f32.mxu0 0.0
        %477 = vmatmul.mubr.f32.gmra.mxu0 %v388
        %v478 = vpop.f32.mrf.mxu0
        %v479 = vadd.f32 %v410, %v478
        %v480 = vpop.f32.mrf.mxu0
        %481 = vdwg.mxu0
        %v482 = vtanh.pop %v479
        %483 = vst [vmem:[%s300] sm:$0xff] %v482
        %s484 = sand.u32 %s165, 1
        %s485 = scalar_lea.sflag [#allocation4], %s484
        %s486 = sand.u32 %s165, 1
        %s487 = smul.addr %s486, 8
        %s488 = scalar_lea.vmem [#allocation8], %s487
        // Predicated region
        $region53: #{tpu_custom_call.1} parent=39 // pred_check
          %p489 = pneg %p175
        $region54: #{tpu_custom_call.1} parent=39 // pred_check_branch
          %491 = sbr.rel (%p489) target = $region56
        $region55: #{tpu_custom_call.1} parent=39 // pred_region
          %s493 = ssub.s32 128, 128
          %494 = vsyncadd %s485, %s493
          %s495 = sadd.s32 %s28, %s27
          %s496 = smul.addr %s495, 128
          %s497 = scalar_lea.hbm %s5, %s496
          %s499 = sshll.u32 %s488, 4
          %s500 = int_to_ptr.vmem [resolvable:$true] %s499
          %502 = dma.vmem_to_hbm [thread:$0]  %s500, 128, %s497, %s485
        $region56: #{tpu_custom_call.1} parent=39 // pred_fallthru
          _
      $region40: #{tpu_custom_call.1} parent=5 // pred_fallthru
        _
      %p503 = scmp.le.s32.totalorder 2, %s18
      // Predicated region
      $region57: #{tpu_custom_call.1} parent=5 // pred_check
        %p504 = pneg %p503
      $region58: #{tpu_custom_call.1} parent=5 // pred_check_branch
        %506 = sbr.rel (%p504) target = $region60
      $region59: #{tpu_custom_call.1} parent=5 // pred_region
        %s507 = ssub.s32 %s18, 2
        // Predicated region
        $region61: #{tpu_custom_call.1} parent=59 // pred_check
          %p508 = pneg %p181
        $region62: #{tpu_custom_call.1} parent=59 // pred_check_branch
          %510 = sbr.rel (%p508) target = $region64
        $region63: #{tpu_custom_call.1} parent=59 // pred_region
          %s511 = sand.u32 %s166, 1
          %s512 = scalar_lea.sflag [#allocation4], %s511
          %s513 = sand.u32 %s166, 1
          %s514 = smul.addr %s513, 8
          %s515 = scalar_lea.vmem [#allocation8], %s514
          %516 = dma.done %s512, 128
        $region64: #{tpu_custom_call.1} parent=59 // pred_fallthru
          _
      $region60: #{tpu_custom_call.1} parent=5 // pred_fallthru
        _
    $region6: #{tpu_custom_call.1} parent=1 // loop_footer
      %s22 = sadd.s32 1, %s18
    $region7: #{tpu_custom_call.1} parent=1 // loop_footer_branch
      %17 = sbr.rel target = $region3
    $region8: #{tpu_custom_call.1} parent=1 // loop_exit
      _
    %517 = vsyncpa [#allocation3], 1
    %s518 = scalar_lea.sflag [#allocation3], 1
    %519 = vsyncpa %s518, 1
    %520 = vsyncpa [#allocation6], 1
    %521 = vsyncpa [#allocation4], 1
    %s522 = scalar_lea.sflag [#allocation4], 1
    %523 = vsyncpa %s522, 1

</llo_original>
